<compile_context>
chip_gen: v6e
topology: v6e:2x2x1
jax: 0.10.0
libtpu: 0.0.40
codegen_flags: <defaults>
</compile_context>

<pallas_src>
import math

import jax
import jax.numpy as jnp
from jax import lax
from jax.experimental import pallas as pl
from jax.experimental.pallas import tpu as pltpu

SMOOTH = 1e-5
WEIGHT_CE = 1.0
WEIGHT_DICE = 1.0

_LANES = 128
_VMEM_BUDGET_BYTES = 26 << 20   # working-set budget (keeps v7x under its 32 MiB scoped default)


def _make_kernel(rows_valid: int, tile_r: int, n_blocks: int,
                 n_split: int, blocks_per_prog: int, ragged: bool):
    def kernel(x_ref, y_ref, inter_ref, pred_ref, gt_ref, bce_ref):
        s = pl.program_id(1)

        # Output blocks are resident across the (arbitrary) spatial axis for the
        # current grid slab -> init once per slab.
        @pl.when(s == 0)
        def _init():
            inter_ref[...] = jnp.zeros_like(inter_ref)
            pred_ref[...] = jnp.zeros_like(pred_ref)
            gt_ref[...] = jnp.zeros_like(gt_ref)
            bce_ref[...] = jnp.zeros_like(bce_ref)

        x = x_ref[...].astype(jnp.float32)   # (1, C, tile_r, 128)
        y = y_ref[...].astype(jnp.float32)   # (1, C, tile_r, 128), one-hot {0,1}

        p = jax.nn.sigmoid(x)
        # BCE-with-logits for one-hot y:
        #   max(x,0) - x*y + log1p(exp(-|x|)) == relu(y ? -x : x) - log(max(p, 1-p))
        # (log term saturates to 0 for |x| >~ 17; error <= ~6e-8/element)
        bce = jnp.maximum(jnp.where(y > 0.0, -x, x), 0.0) \
            - jnp.log(jnp.maximum(p, 1.0 - p))

        def accum(pv, yv, bv):
            inter_ref[...] += jnp.sum(pv * yv, axis=2)   # (1, C, 128)
            pred_ref[...] += jnp.sum(pv, axis=2)
            gt_ref[...] += jnp.sum(yv, axis=2)
            bce_ref[...] += jnp.sum(bv, axis=2)

        if not ragged:
            # tile_r divides the row count -> never any masking.
            accum(p, y, bce)
        else:
            # Only the LAST global row-block is ragged (its tail rows are
            # unspecified DMA padding); mask it there and nowhere else.
            if n_split == 1:
                sb = s
            else:
                sb = (pl.program_id(0) % n_split) * blocks_per_prog + s
            is_last = sb == n_blocks - 1

            @pl.when(jnp.logical_not(is_last))
            def _bulk():
                accum(p, y, bce)

            @pl.when(is_last)
            def _tail():
                row = lax.broadcasted_iota(jnp.int32, p.shape, 2)
                valid = (sb * tile_r + row) < rows_valid
                accum(jnp.where(valid, p, 0.0),
                      jnp.where(valid, y, 0.0),
                      jnp.where(valid, bce, 0.0))

    return kernel


def _pick_tile_r(rows: int, cap: int, want_two_blocks: bool):
    """Pick a row-tile size. Returns (tile_r, ragged_last_block)."""
    if rows <= cap:
        if want_two_blocks and rows >= 16:
            # B == 1: split the spatial range into 2 slabs so both v7x TCs get work.
            t = -(-((rows + 1) // 2) // 8) * 8        # smallest multiple of 8 >= ceil(rows/2)
            if t < rows:
                return t, (2 * t != rows)
        return rows, False                             # single full-extent block
    cap8 = max(8, cap - cap % 8)
    # Prefer a multiple-of-8 divisor of rows -> the grid divides evenly, no masking at all.
    t = cap8
    while t >= 8 and rows % t != 0:
        t -= 8
    if t >= max(8, cap8 // 4):
        return t, False
    return cap8, True                                  # ragged last block (masked in-kernel)


def dc_and_bce_loss(net_output: jax.Array, target: jax.Array,
                    weight_ce: float = WEIGHT_CE,
                    weight_dice: float = WEIGHT_DICE,
                    smooth: float = SMOOTH,
                    vmem_budget_bytes: int = _VMEM_BUDGET_BYTES) -> jax.Array:
    """net_output, target: (B, C, *spatial); target one-hot (any dtype)."""
    B, C = net_output.shape[:2]
    S = math.prod(net_output.shape[2:])

    # Ship targets narrow (exact for one-hot {0,1}); keep logits in their own dtype.
    if target.dtype.itemsize > 2 or not jnp.issubdtype(target.dtype, jnp.floating):
        target = target.astype(jnp.bfloat16)

    x = net_output.reshape(B, C, S)
    y = target.reshape(B, C, S)

    # Lane-dense spatial layout: (rows, 128).  For 128-aligned S (typical nnU-Net
    # patch sizes) the reshape is a free bitcast — no HBM copy at all.
    rows = -(-S // _LANES)
    pad = rows * _LANES - S
    if pad:
        # TODO(synk): non-128-aligned spatial sizes take one minimal zero-pad copy;
        # its contribution is corrected analytically in the epilogue (no in-kernel mask).
        x = jnp.pad(x, ((0, 0), (0, 0), (0, pad)))
        y = jnp.pad(y, ((0, 0), (0, 0), (0, pad)))
    x = x.reshape(B, C, rows, _LANES)
    y = y.reshape(B, C, rows, _LANES)

    # Tile sizing from a VMEM working-set budget:
    #   2x-buffered inputs + ~6 live f32 block temporaries (x, y, p, bce, scratch).
    per_row_in = C * _LANES * (x.dtype.itemsize + y.dtype.itemsize)
    per_row_f32 = C * _LANES * 4
    vmem_per_row = 2 * per_row_in + 6 * per_row_f32
    cap = max(8, vmem_budget_bytes // vmem_per_row)

    tile_r, ragged = _pick_tile_r(rows, cap, want_two_blocks=(B == 1))
    n_blocks = -(-rows // tile_r)
    n_split = 2 if (B == 1 and n_blocks >= 2 and n_blocks % 2 == 0) else 1
    blocks_per_prog = n_blocks // n_split
    G = B * n_split

    if n_split == 1:
        in_map = lambda g, s: (g, 0, s, 0)
    else:
        in_map = lambda g, s: (g // n_split, 0, (g % n_split) * blocks_per_prog + s, 0)

    in_spec = pl.BlockSpec((1, C, tile_r, _LANES), in_map)
    stat_shape = jax.ShapeDtypeStruct((G, C, _LANES), jnp.float32)
    stat_spec = pl.BlockSpec((1, C, _LANES), lambda g, s: (g, 0, 0))

    kernel = _make_kernel(rows, tile_r, n_blocks, n_split, blocks_per_prog, ragged)

    vmem_need = tile_r * vmem_per_row + 8 * 4 * C * _LANES * 4 + (3 << 20)
    vmem_limit = int(min(100 << 20, max(8 << 20, vmem_need)))

    inter_p, pred_p, gt_p, bce_p = pl.pallas_call(
        kernel,
        out_shape=(stat_shape, stat_shape, stat_shape, stat_shape),
        grid_spec=pltpu.PrefetchScalarGridSpec(
            num_scalar_prefetch=0,
            grid=(G, blocks_per_prog),
            in_specs=[in_spec, in_spec],
            out_specs=(stat_spec, stat_spec, stat_spec, stat_spec),
        ),
        compiler_params=pltpu.CompilerParams(
            dimension_semantics=("parallel", "arbitrary"),
            vmem_limit_bytes=vmem_limit,
        ),
    )(x, y)

    # Tiny epilogue: combine per-(slab, class, lane) partials.
    intersect = jnp.sum(inter_p, axis=(0, 2))                    # (C,)
    sum_pred = jnp.sum(pred_p, axis=(0, 2))                      # (C,)
    sum_gt = jnp.sum(gt_p, axis=(0, 2))                          # (C,)
    bce_sum = jnp.sum(bce_p)
    if pad:
        # Pad logits are exactly 0 and pad targets 0 -> each pad element added exactly
        # 0.5 to sum_pred and log(2) to the BCE sum, and nothing to intersect / gt.
        sum_pred = sum_pred - jnp.float32(B * pad * 0.5)
        bce_sum = bce_sum - jnp.float32(B * C * pad * math.log(2.0))

    dc = (2.0 * intersect + smooth) / jnp.clip(sum_pred + sum_gt + smooth, 1e-8)
    dc_loss = -jnp.mean(dc)
    ce_loss = bce_sum / jnp.float32(B * C * S)
    return weight_ce * ce_loss + weight_dice * dc_loss


def _reference(net_output, target, weight_ce=WEIGHT_CE,
               weight_dice=WEIGHT_DICE, smooth=SMOOTH):
    B, C = net_output.shape[:2]
    x = net_output.reshape(B, C, -1).astype(jnp.float32)
    y = target.reshape(B, C, -1).astype(jnp.float32)
    p = jax.nn.sigmoid(x)
    intersect = jnp.sum(p * y, axis=(0, 2))
    sum_pred = jnp.sum(p, axis=(0, 2))
    sum_gt = jnp.sum(y, axis=(0, 2))
    dc = (2.0 * intersect + smooth) / jnp.clip(sum_pred + sum_gt + smooth, 1e-8)
    dc_loss = -jnp.mean(dc)
    bce = jnp.maximum(x, 0.0) - x * y + jnp.log1p(jnp.exp(-jnp.abs(x)))
    ce_loss = jnp.mean(bce)
    return weight_ce * ce_loss + weight_dice * dc_loss


if __name__ == "__main__":
    key = jax.random.PRNGKey(0)

    cases = [
        # (B, C, H, W, vmem_budget)  — all small, each exercises a different code path
        (2, 4, 16, 16, _VMEM_BUDGET_BYTES),   # 128-aligned, single full-extent block
        (1, 3, 32, 128, _VMEM_BUDGET_BYTES),  # B==1 -> 2-way parallel spatial split (v7x)
        (2, 2, 20, 128, 96 * 1024),           # tiny budget -> multi-block + ragged last block
        (2, 3, 16, 20, _VMEM_BUDGET_BYTES),   # S % 128 != 0 -> zero-pad + analytic correction
    ]

    for i, (B, C, H, W, budget) in enumerate(cases):
        key, k1, k2 = jax.random.split(key, 3)
        shape = (B, C, H, W)
        # raw logits (no nonlinearity applied in the network), shipped as bf16
        net_output = jax.random.normal(k1, shape, dtype=jnp.float32).astype(jnp.bfloat16)
        # one-hot-style binary region target
        target = (jax.random.uniform(k2, shape) > 0.5).astype(jnp.bfloat16)

        loss = jax.block_until_ready(
            dc_and_bce_loss(net_output, target, vmem_budget_bytes=budget))
        ref = jax.block_until_ready(_reference(net_output, target))
        assert jnp.allclose(loss, ref, atol=3e-5, rtol=3e-5), (i, loss, ref)

    print("KERNEL_OK")
</pallas_src>

<mosaic_0001>
module attributes {stable_mosaic.version = 11 : i64} {
  func.func @kernel(%arg0: i32, %arg1: i32, %arg2: memref<1x4x2x128xbf16, #tpu.memory_space<vmem>>, %arg3: memref<1x4x2x128xbf16, #tpu.memory_space<vmem>>, %arg4: memref<1x4x128xf32, #tpu.memory_space<vmem>>, %arg5: memref<1x4x128xf32, #tpu.memory_space<vmem>>, %arg6: memref<1x4x128xf32, #tpu.memory_space<vmem>>, %arg7: memref<1x4x128xf32, #tpu.memory_space<vmem>>) attributes {dimension_semantics = [#tpu.dimension_semantics<parallel>, #tpu.dimension_semantics<arbitrary>], iteration_bounds = array<i64: 2, 1>, scalar_prefetch = 0 : i64, scratch_operands = 0 : i64, tpu.core_type = #tpu.core_type<tc>, window_params = [{transform_indices = @transform_0, window_bounds = array<i64: 1, 4, 2, 128>}, {transform_indices = @transform_1, window_bounds = array<i64: 1, 4, 2, 128>}, {transform_indices = @transform_2, window_bounds = array<i64: 1, 4, 128>}, {transform_indices = @transform_3, window_bounds = array<i64: 1, 4, 128>}, {transform_indices = @transform_4, window_bounds = array<i64: 1, 4, 128>}, {transform_indices = @transform_5, window_bounds = array<i64: 1, 4, 128>}]} {
    %c0_i32 = arith.constant 0 : i32
    %0 = arith.cmpi eq, %arg1, %c0_i32 : i32
    %1 = arith.extui %0 : i1 to i32
    %c0_i32_0 = arith.constant 0 : i32
    %2 = arith.cmpi ne, %1, %c0_i32_0 : i32
    scf.if %2 {
      %cst_40 = arith.constant 0.000000e+00 : f32
      %41 = vector.broadcast %cst_40 : f32 to vector<1x4x128xf32>
      %c0_41 = arith.constant 0 : index
      %c0_42 = arith.constant 0 : index
      %c0_43 = arith.constant 0 : index
      %42 = vector.load %arg4[%c0_41, %c0_42, %c0_43] : memref<1x4x128xf32, #tpu.memory_space<vmem>>, vector<1x4x128xf32>
      tpu.vector_store %arg4[%c0_41, %c0_42, %c0_43], %41 {strides = array<i32>} : memref<1x4x128xf32, #tpu.memory_space<vmem>>, vector<1x4x128xf32>,
      %cst_44 = arith.constant 0.000000e+00 : f32
      %43 = vector.broadcast %cst_44 : f32 to vector<1x4x128xf32>
      %c0_45 = arith.constant 0 : index
      %c0_46 = arith.constant 0 : index
      %c0_47 = arith.constant 0 : index
      %44 = vector.load %arg5[%c0_45, %c0_46, %c0_47] : memref<1x4x128xf32, #tpu.memory_space<vmem>>, vector<1x4x128xf32>
      tpu.vector_store %arg5[%c0_45, %c0_46, %c0_47], %43 {strides = array<i32>} : memref<1x4x128xf32, #tpu.memory_space<vmem>>, vector<1x4x128xf32>,
      %cst_48 = arith.constant 0.000000e+00 : f32
      %45 = vector.broadcast %cst_48 : f32 to vector<1x4x128xf32>
      %c0_49 = arith.constant 0 : index
      %c0_50 = arith.constant 0 : index
      %c0_51 = arith.constant 0 : index
      %46 = vector.load %arg6[%c0_49, %c0_50, %c0_51] : memref<1x4x128xf32, #tpu.memory_space<vmem>>, vector<1x4x128xf32>
      tpu.vector_store %arg6[%c0_49, %c0_50, %c0_51], %45 {strides = array<i32>} : memref<1x4x128xf32, #tpu.memory_space<vmem>>, vector<1x4x128xf32>,
      %cst_52 = arith.constant 0.000000e+00 : f32
      %47 = vector.broadcast %cst_52 : f32 to vector<1x4x128xf32>
      %c0_53 = arith.constant 0 : index
      %c0_54 = arith.constant 0 : index
      %c0_55 = arith.constant 0 : index
      %48 = vector.load %arg7[%c0_53, %c0_54, %c0_55] : memref<1x4x128xf32, #tpu.memory_space<vmem>>, vector<1x4x128xf32>
      tpu.vector_store %arg7[%c0_53, %c0_54, %c0_55], %47 {strides = array<i32>} : memref<1x4x128xf32, #tpu.memory_space<vmem>>, vector<1x4x128xf32>,
    } else {
    }
    %c0 = arith.constant 0 : index
    %c0_1 = arith.constant 0 : index
    %c0_2 = arith.constant 0 : index
    %c0_3 = arith.constant 0 : index
    %3 = vector.load %arg2[%c0, %c0_1, %c0_2, %c0_3] : memref<1x4x2x128xbf16, #tpu.memory_space<vmem>>, vector<1x4x2x128xbf16>
    %4 = arith.extf %3 : vector<1x4x2x128xbf16> to vector<1x4x2x128xf32>
    %c0_4 = arith.constant 0 : index
    %c0_5 = arith.constant 0 : index
    %c0_6 = arith.constant 0 : index
    %c0_7 = arith.constant 0 : index
    %5 = vector.load %arg3[%c0_4, %c0_5, %c0_6, %c0_7] : memref<1x4x2x128xbf16, #tpu.memory_space<vmem>>, vector<1x4x2x128xbf16>
    %6 = arith.extf %5 : vector<1x4x2x128xbf16> to vector<1x4x2x128xf32>
    %7 = arith.negf %4 : vector<1x4x2x128xf32>
    %8 = math.exp %7 : vector<1x4x2x128xf32>
    %cst = arith.constant 1.000000e+00 : f32
    %9 = vector.broadcast %cst : f32 to vector<1x4x2x128xf32>
    %10 = arith.addf %9, %8 : vector<1x4x2x128xf32>
    %11 = arith.divf %9, %10 : vector<1x4x2x128xf32>
    %cst_8 = arith.constant 0.000000e+00 : f32
    %12 = vector.broadcast %cst_8 : f32 to vector<1x4x2x128xf32>
    %13 = arith.cmpf ogt, %6, %12 : vector<1x4x2x128xf32>
    %cst_9 = arith.constant 0.000000e+00 : f32
    %14 = vector.broadcast %cst_9 : f32 to vector<1x4x2x128xf32>
    %15 = arith.subf %14, %4 : vector<1x4x2x128xf32>
    %16 = arith.select %13, %15, %4 : vector<1x4x2x128xi1>, vector<1x4x2x128xf32>
    %cst_10 = arith.constant 0.000000e+00 : f32
    %17 = vector.broadcast %cst_10 : f32 to vector<1x4x2x128xf32>
    %18 = arith.maximumf %16, %17 : vector<1x4x2x128xf32>
    %cst_11 = arith.constant 1.000000e+00 : f32
    %19 = vector.broadcast %cst_11 : f32 to vector<1x4x2x128xf32>
    %20 = arith.subf %19, %11 : vector<1x4x2x128xf32>
    %21 = arith.maximumf %11, %20 : vector<1x4x2x128xf32>
    %22 = math.log %21 : vector<1x4x2x128xf32>
    %23 = arith.subf %18, %22 : vector<1x4x2x128xf32>
    %c0_12 = arith.constant 0 : index
    %c0_13 = arith.constant 0 : index
    %c0_14 = arith.constant 0 : index
    %24 = vector.load %arg4[%c0_12, %c0_13, %c0_14] : memref<1x4x128xf32, #tpu.memory_space<vmem>>, vector<1x4x128xf32>
    %25 = arith.mulf %11, %6 : vector<1x4x2x128xf32>
    %cst_15 = arith.constant dense<0.000000e+00> : vector<1x4x128xf32>
    %26 = vector.multi_reduction <add>, %25, %cst_15 [2] : vector<1x4x2x128xf32> to vector<1x4x128xf32>
    %27 = arith.addf %24, %26 : vector<1x4x128xf32>
    %c0_16 = arith.constant 0 : index
    %c0_17 = arith.constant 0 : index
    %c0_18 = arith.constant 0 : index
    %28 = vector.load %arg4[%c0_16, %c0_17, %c0_18] : memref<1x4x128xf32, #tpu.memory_space<vmem>>, vector<1x4x128xf32>
    tpu.vector_store %arg4[%c0_16, %c0_17, %c0_18], %27 {strides = array<i32>} : memref<1x4x128xf32, #tpu.memory_space<vmem>>, vector<1x4x128xf32>,
    %c0_19 = arith.constant 0 : index
    %c0_20 = arith.constant 0 : index
    %c0_21 = arith.constant 0 : index
    %29 = vector.load %arg5[%c0_19, %c0_20, %c0_21] : memref<1x4x128xf32, #tpu.memory_space<vmem>>, vector<1x4x128xf32>
    %cst_22 = arith.constant dense<0.000000e+00> : vector<1x4x128xf32>
    %30 = vector.multi_reduction <add>, %11, %cst_22 [2] : vector<1x4x2x128xf32> to vector<1x4x128xf32>
    %31 = arith.addf %29, %30 : vector<1x4x128xf32>
    %c0_23 = arith.constant 0 : index
    %c0_24 = arith.constant 0 : index
    %c0_25 = arith.constant 0 : index
    %32 = vector.load %arg5[%c0_23, %c0_24, %c0_25] : memref<1x4x128xf32, #tpu.memory_space<vmem>>, vector<1x4x128xf32>
    tpu.vector_store %arg5[%c0_23, %c0_24, %c0_25], %31 {strides = array<i32>} : memref<1x4x128xf32, #tpu.memory_space<vmem>>, vector<1x4x128xf32>,
    %c0_26 = arith.constant 0 : index
    %c0_27 = arith.constant 0 : index
    %c0_28 = arith.constant 0 : index
    %33 = vector.load %arg6[%c0_26, %c0_27, %c0_28] : memref<1x4x128xf32, #tpu.memory_space<vmem>>, vector<1x4x128xf32>
    %cst_29 = arith.constant dense<0.000000e+00> : vector<1x4x128xf32>
    %34 = vector.multi_reduction <add>, %6, %cst_29 [2] : vector<1x4x2x128xf32> to vector<1x4x128xf32>
    %35 = arith.addf %33, %34 : vector<1x4x128xf32>
    %c0_30 = arith.constant 0 : index
    %c0_31 = arith.constant 0 : index
    %c0_32 = arith.constant 0 : index
    %36 = vector.load %arg6[%c0_30, %c0_31, %c0_32] : memref<1x4x128xf32, #tpu.memory_space<vmem>>, vector<1x4x128xf32>
    tpu.vector_store %arg6[%c0_30, %c0_31, %c0_32], %35 {strides = array<i32>} : memref<1x4x128xf32, #tpu.memory_space<vmem>>, vector<1x4x128xf32>,
    %c0_33 = arith.constant 0 : index
    %c0_34 = arith.constant 0 : index
    %c0_35 = arith.constant 0 : index
    %37 = vector.load %arg7[%c0_33, %c0_34, %c0_35] : memref<1x4x128xf32, #tpu.memory_space<vmem>>, vector<1x4x128xf32>
    %cst_36 = arith.constant dense<0.000000e+00> : vector<1x4x128xf32>
    %38 = vector.multi_reduction <add>, %23, %cst_36 [2] : vector<1x4x2x128xf32> to vector<1x4x128xf32>
    %39 = arith.addf %37, %38 : vector<1x4x128xf32>
    %c0_37 = arith.constant 0 : index
    %c0_38 = arith.constant 0 : index
    %c0_39 = arith.constant 0 : index
    %40 = vector.load %arg7[%c0_37, %c0_38, %c0_39] : memref<1x4x128xf32, #tpu.memory_space<vmem>>, vector<1x4x128xf32>
    tpu.vector_store %arg7[%c0_37, %c0_38, %c0_39], %39 {strides = array<i32>} : memref<1x4x128xf32, #tpu.memory_space<vmem>>, vector<1x4x128xf32>,
    return
  }
  func.func @transform_0(%arg0: i32, %arg1: i32) -> (i32, i32, i32, i32) {
    %c0_i32 = arith.constant 0 : i32
    %c0_i32_0 = arith.constant 0 : i32
    %c0_i32_1 = arith.constant 0 : i32
    return %arg0, %c0_i32, %arg1, %c0_i32_0 : i32, i32, i32, i32
  }
  func.func @transform_1(%arg0: i32, %arg1: i32) -> (i32, i32, i32, i32) {
    %c0_i32 = arith.constant 0 : i32
    %c0_i32_0 = arith.constant 0 : i32
    %c0_i32_1 = arith.constant 0 : i32
    return %arg0, %c0_i32, %arg1, %c0_i32_0 : i32, i32, i32, i32
  }
  func.func @transform_2(%arg0: i32, %arg1: i32) -> (i32, i32, i32) {
    %c0_i32 = arith.constant 0 : i32
    %c0_i32_0 = arith.constant 0 : i32
    %c0_i32_1 = arith.constant 0 : i32
    return %arg0, %c0_i32, %c0_i32_0 : i32, i32, i32
  }
  func.func @transform_3(%arg0: i32, %arg1: i32) -> (i32, i32, i32) {
    %c0_i32 = arith.constant 0 : i32
    %c0_i32_0 = arith.constant 0 : i32
    %c0_i32_1 = arith.constant 0 : i32
    return %arg0, %c0_i32, %c0_i32_0 : i32, i32, i32
  }
  func.func @transform_4(%arg0: i32, %arg1: i32) -> (i32, i32, i32) {
    %c0_i32 = arith.constant 0 : i32
    %c0_i32_0 = arith.constant 0 : i32
    %c0_i32_1 = arith.constant 0 : i32
    return %arg0, %c0_i32, %c0_i32_0 : i32, i32, i32
  }
  func.func @transform_5(%arg0: i32, %arg1: i32) -> (i32, i32, i32) {
    %c0_i32 = arith.constant 0 : i32
    %c0_i32_0 = arith.constant 0 : i32
    %c0_i32_1 = arith.constant 0 : i32
    return %arg0, %c0_i32, %c0_i32_0 : i32, i32, i32
  }
}

</mosaic_0001>

<llo_original>
// kernel: tpu_custom_call.1
$region0: #{tpu_custom_call.1}
  #allocation0 [shape = 'u32[]', space=smem, size = 0x4, offset = 0x4, fixed_abs, tag = 'smem constant byte address 0x4 - core index']
  #allocation1 [shape = 'u32[144,128]{1,0:T(1,128)}', space=vmem, size = 0x12000, scoped, tag = 'internal scratch']
  %s0 = inlined_call_operand.hbm [shape: bf16[2,4,2,128], index: 0, kind: input, shape index: {}]
  %s1 = inlined_call_operand.hbm [shape: bf16[2,4,2,128], index: 1, kind: input, shape index: {}]
  %s2 = inlined_call_operand.hbm [shape: f32[2,4,128], index: 2, kind: output, shape index: {0}]
  %s3 = inlined_call_operand.hbm [shape: f32[2,4,128], index: 3, kind: output, shape index: {1}]
  %s4 = inlined_call_operand.hbm [shape: f32[2,4,128], index: 4, kind: output, shape index: {2}]
  %s5 = inlined_call_operand.hbm [shape: f32[2,4,128], index: 5, kind: output, shape index: {3}]
  %6 = xla_tuple %s2, %s3, %s4, %s5
  %s7 = sld [smem:[#allocation0]]
  $region77: #{tpu_custom_call.1} parent=0
    _
  %s9 = ssub.s32 1, %s7
  %s10 = scalar_select 0, %s9, %s7
  $region1: #{tpu_custom_call.1} parent=0
    #allocation2 [shape = 'u8[4096]{0}', space=vmem, size = 0x1000, scoped, tag = 'input window, operand 0']
    #allocation3 [shape = 's32[2]{0}', space=sflag, size = 0x8, scoped, tag = 'scoped memory for tpu_custom_call.1']
    #allocation4 [shape = 's32[2]{0}', space=sflag, size = 0x8, scoped, tag = 'scoped memory for tpu_custom_call.1']
    #allocation5 [shape = 'u8[4096]{0}', space=vmem, size = 0x1000, scoped, tag = 'input window, operand 1']
    #allocation6 [shape = 's32[2]{0}', space=sflag, size = 0x8, scoped, tag = 'scoped memory for tpu_custom_call.1']
    #allocation7 [shape = 'u8[4096]{0}', space=vmem, size = 0x1000, scoped, tag = 'output window, operand 0']
    #allocation8 [shape = 'u8[4096]{0}', space=vmem, size = 0x1000, scoped, tag = 'output window, operand 1']
    #allocation9 [shape = 's32[2]{0}', space=sflag, size = 0x8, scoped, tag = 'scoped memory for tpu_custom_call.1']
    #allocation10 [shape = 'u8[4096]{0}', space=vmem, size = 0x1000, scoped, tag = 'output window, operand 2']
    #allocation11 [shape = 'u8[4096]{0}', space=vmem, size = 0x1000, scoped, tag = 'output window, operand 3']
    #allocation12 [shape = 's32[2]{0}', space=sflag, size = 0x8, scoped, tag = 'scoped memory for tpu_custom_call.1']
    %11 = vsyncpa [#allocation3], 0
    %s12 = scalar_lea.sflag [#allocation3], 1
    %13 = vsyncpa %s12, 0
    %14 = vsyncpa [#allocation6], 0
    %s15 = scalar_lea.sflag [#allocation6], 1
    %16 = vsyncpa %s15, 0
    %17 = vsyncpa [#allocation4], 0
    %s18 = scalar_lea.sflag [#allocation4], 1
    %19 = vsyncpa %s18, 0
    %20 = vsyncpa [#allocation9], 0
    %s21 = scalar_lea.sflag [#allocation9], 1
    %22 = vsyncpa %s21, 0
    %23 = vsyncpa [#allocation12], 0
    %s24 = scalar_lea.sflag [#allocation12], 1
    %25 = vsyncpa %s24, 0
    loop: start=0, step=1, limit=4
    $region2: #{tpu_custom_call.1} parent=1 // loop_pre_header
      _
    $region3: #{tpu_custom_call.1} parent=1 // loop_header
      %s27 = sphi 0, %s31
      %p28 = scmp.ge.s32.totalorder %s27, 4
      %s34 = sphi 0, %s46
      %s35 = sphi 0, %s42
      %s36 = sphi 0, %s34
      %s37 = sphi 0, %s35
      %s38 = sphi 0, %s36
      %s39 = sphi 0, %s37
      %s51 = sphi 0, %s53
      %s54 = sphi 0, %s51
      %s55 = sphi 0, %s54
      %s71 = sphi 0, %s55
      %s79 = sphi 0, %s81
      %s82 = sphi 0, %s79
      %s83 = sphi 0, %s82
      %s99 = sphi 0, %s83
      %s105 = sphi 0, %s107
      %s108 = sphi 0, %s105
      %s109 = sphi 0, %s108
      %s125 = sphi 0, %s109
      %s131 = sphi 0, %s133
      %s134 = sphi 0, %s131
      %s135 = sphi 0, %s134
      %s151 = sphi 0, %s135
      %s157 = sphi 0, %s159
      %s160 = sphi 0, %s157
      %s161 = sphi 0, %s160
      %s177 = sphi 0, %s161
      %s183 = sphi 0, %s185
      %s186 = sphi 0, %s183
      %s187 = sphi 0, %s186
      %s203 = sphi 0, %s187
    $region4: #{tpu_custom_call.1} parent=1 // loop_header_branch
      %30 = sbr.rel (%p28) target = $region8
    $region5: #{tpu_custom_call.1} parent=1 // loop_body
      %s32 = ssub.s32 %s27, 1
      %s33 = ssub.s32 %s27, 2
      %s40 = sadd.s32 1, %s35
      %p41 = scmp.ge.s32.totalorder %s40, 1
      %s42 = scalar_select %p41, 0, %s40
      %s43 = sadd.s32 1, %s34
      %s44 = scalar_select %p41, %s43, %s34
      %p45 = scmp.ge.s32.totalorder %s44, 2
      %s46 = scalar_select %p45, 0, %s44
      %s47 = ssub.s32 %s34, %s46
      %s48 = ssub.s32 %s35, %s42
      %s49 = sor.u32 %s47, %s48
      %p50 = scmp.eq.s32.totalorder %s49, 0
      %s52 = sadd.s32 %s51, 1
      %s53 = scalar_select %p50, %s51, %s52
      %p56 = pneg %p50
      %p57 = scmp.eq.s32.totalorder %s27, 1
      %p58 = por %p56, %p57
      %p59 = scmp.ne.s32.totalorder %s51, %s54
      %p60 = scmp.eq.s32.totalorder %s27, 0
      %p61 = por %p59, %p60
      %p62 = scmp.ne.s32.totalorder %s51, %s54
      %p63 = scmp.eq.s32.totalorder %s32, 1
      %p64 = por %p62, %p63
      %p65 = scmp.ne.s32.totalorder %s54, %s55
      %p66 = scmp.eq.s32.totalorder %s32, 0
      %p67 = por %p65, %p66
      %p68 = scmp.ne.s32.totalorder %s54, %s55
      %p69 = scmp.eq.s32.totalorder %s33, 1
      %p70 = por %p68, %p69
      %p72 = scmp.ne.s32.totalorder %s55, %s71
      %p73 = scmp.eq.s32.totalorder %s33, 0
      %p74 = por %p72, %p73
      %s75 = ssub.s32 %s34, %s46
      %s76 = ssub.s32 %s35, %s42
      %s77 = sor.u32 %s75, %s76
      %p78 = scmp.eq.s32.totalorder %s77, 0
      %s80 = sadd.s32 %s79, 1
      %s81 = scalar_select %p78, %s79, %s80
      %p84 = pneg %p78
      %p85 = scmp.eq.s32.totalorder %s27, 1
      %p86 = por %p84, %p85
      %p87 = scmp.ne.s32.totalorder %s79, %s82
      %p88 = scmp.eq.s32.totalorder %s27, 0
      %p89 = por %p87, %p88
      %p90 = scmp.ne.s32.totalorder %s79, %s82
      %p91 = scmp.eq.s32.totalorder %s32, 1
      %p92 = por %p90, %p91
      %p93 = scmp.ne.s32.totalorder %s82, %s83
      %p94 = scmp.eq.s32.totalorder %s32, 0
      %p95 = por %p93, %p94
      %p96 = scmp.ne.s32.totalorder %s82, %s83
      %p97 = scmp.eq.s32.totalorder %s33, 1
      %p98 = por %p96, %p97
      %p100 = scmp.ne.s32.totalorder %s83, %s99
      %p101 = scmp.eq.s32.totalorder %s33, 0
      %p102 = por %p100, %p101
      %s103 = ssub.s32 %s34, %s46
      %p104 = scmp.eq.s32.totalorder %s103, 0
      %s106 = sadd.s32 %s105, 1
      %s107 = scalar_select %p104, %s105, %s106
      %p110 = pneg %p104
      %p111 = scmp.eq.s32.totalorder %s27, 1
      %p112 = por %p110, %p111
      %p113 = scmp.ne.s32.totalorder %s105, %s108
      %p114 = scmp.eq.s32.totalorder %s27, 0
      %p115 = por %p113, %p114
      %p116 = scmp.ne.s32.totalorder %s105, %s108
      %p117 = scmp.eq.s32.totalorder %s32, 1
      %p118 = por %p116, %p117
      %p119 = scmp.ne.s32.totalorder %s108, %s109
      %p120 = scmp.eq.s32.totalorder %s32, 0
      %p121 = por %p119, %p120
      %p122 = scmp.ne.s32.totalorder %s108, %s109
      %p123 = scmp.eq.s32.totalorder %s33, 1
      %p124 = por %p122, %p123
      %p126 = scmp.ne.s32.totalorder %s109, %s125
      %p127 = scmp.eq.s32.totalorder %s33, 0
      %p128 = por %p126, %p127
      %s129 = ssub.s32 %s34, %s46
      %p130 = scmp.eq.s32.totalorder %s129, 0
      %s132 = sadd.s32 %s131, 1
      %s133 = scalar_select %p130, %s131, %s132
      %p136 = pneg %p130
      %p137 = scmp.eq.s32.totalorder %s27, 1
      %p138 = por %p136, %p137
      %p139 = scmp.ne.s32.totalorder %s131, %s134
      %p140 = scmp.eq.s32.totalorder %s27, 0
      %p141 = por %p139, %p140
      %p142 = scmp.ne.s32.totalorder %s131, %s134
      %p143 = scmp.eq.s32.totalorder %s32, 1
      %p144 = por %p142, %p143
      %p145 = scmp.ne.s32.totalorder %s134, %s135
      %p146 = scmp.eq.s32.totalorder %s32, 0
      %p147 = por %p145, %p146
      %p148 = scmp.ne.s32.totalorder %s134, %s135
      %p149 = scmp.eq.s32.totalorder %s33, 1
      %p150 = por %p148, %p149
      %p152 = scmp.ne.s32.totalorder %s135, %s151
      %p153 = scmp.eq.s32.totalorder %s33, 0
      %p154 = por %p152, %p153
      %s155 = ssub.s32 %s34, %s46
      %p156 = scmp.eq.s32.totalorder %s155, 0
      %s158 = sadd.s32 %s157, 1
      %s159 = scalar_select %p156, %s157, %s158
      %p162 = pneg %p156
      %p163 = scmp.eq.s32.totalorder %s27, 1
      %p164 = por %p162, %p163
      %p165 = scmp.ne.s32.totalorder %s157, %s160
      %p166 = scmp.eq.s32.totalorder %s27, 0
      %p167 = por %p165, %p166
      %p168 = scmp.ne.s32.totalorder %s157, %s160
      %p169 = scmp.eq.s32.totalorder %s32, 1
      %p170 = por %p168, %p169
      %p171 = scmp.ne.s32.totalorder %s160, %s161
      %p172 = scmp.eq.s32.totalorder %s32, 0
      %p173 = por %p171, %p172
      %p174 = scmp.ne.s32.totalorder %s160, %s161
      %p175 = scmp.eq.s32.totalorder %s33, 1
      %p176 = por %p174, %p175
      %p178 = scmp.ne.s32.totalorder %s161, %s177
      %p179 = scmp.eq.s32.totalorder %s33, 0
      %p180 = por %p178, %p179
      %s181 = ssub.s32 %s34, %s46
      %p182 = scmp.eq.s32.totalorder %s181, 0
      %s184 = sadd.s32 %s183, 1
      %s185 = scalar_select %p182, %s183, %s184
      %p188 = pneg %p182
      %p189 = scmp.eq.s32.totalorder %s27, 1
      %p190 = por %p188, %p189
      %p191 = scmp.ne.s32.totalorder %s183, %s186
      %p192 = scmp.eq.s32.totalorder %s27, 0
      %p193 = por %p191, %p192
      %p194 = scmp.ne.s32.totalorder %s183, %s186
      %p195 = scmp.eq.s32.totalorder %s32, 1
      %p196 = por %p194, %p195
      %p197 = scmp.ne.s32.totalorder %s186, %s187
      %p198 = scmp.eq.s32.totalorder %s32, 0
      %p199 = por %p197, %p198
      %p200 = scmp.ne.s32.totalorder %s186, %s187
      %p201 = scmp.eq.s32.totalorder %s33, 1
      %p202 = por %p200, %p201
      %p204 = scmp.ne.s32.totalorder %s187, %s203
      %p205 = scmp.eq.s32.totalorder %s33, 0
      %p206 = por %p204, %p205
      %p207 = scmp.le.s32.totalorder 1, %s27
      %p208 = scmp.lt.s32.totalorder %s27, 3
      %p209 = pnand %p207, %p208
      %p210 = pneg %p209
      // Predicated region
      $region9: #{tpu_custom_call.1} parent=5 // pred_check
        _
      $region10: #{tpu_custom_call.1} parent=5 // pred_check_branch
        %212 = sbr.rel (%p209) target = $region12
      $region11: #{tpu_custom_call.1} parent=5 // pred_region
        %s213 = ssub.s32 %s27, 1
      $region12: #{tpu_custom_call.1} parent=5 // pred_fallthru
        _
      %p214 = scmp.lt.s32.totalorder %s27, 2
      // Predicated region
      $region13: #{tpu_custom_call.1} parent=5 // pred_check
        %p215 = pneg %p214
      $region14: #{tpu_custom_call.1} parent=5 // pred_check_branch
        %217 = sbr.rel (%p215) target = $region16
      $region15: #{tpu_custom_call.1} parent=5 // pred_region
        // Predicated region
        $region17: #{tpu_custom_call.1} parent=15 // pred_check
          %p218 = pneg %p61
        $region18: #{tpu_custom_call.1} parent=15 // pred_check_branch
          %220 = sbr.rel (%p218) target = $region20
        $region19: #{tpu_custom_call.1} parent=15 // pred_region
          %s221 = sand.u32 %s51, 1
          %s222 = scalar_lea.sflag [#allocation3], %s221
          %s223 = sand.u32 %s51, 1
          %s224 = smul.addr %s223, 4
          %s225 = scalar_lea.vmem [#allocation2], %s224
          %s227 = ssub.s32 64, 64
          %228 = vsyncadd %s222, %s227
          %s229 = smul.addr %s34, 4
          %s230 = sadd.s32 %s35, %s229
          %s231 = smul.addr %s230, 16
          %s232 = scalar_lea.hbm %s0, %s231
          %s233 = sshll.u32 %s225, 4
          %s234 = int_to_ptr.vmem [resolvable:$true] %s233
          %239 = dma.hbm_to_vmem [thread:$0]  %s232, 64, %s234, %s222, 16, 16, 1
        $region20: #{tpu_custom_call.1} parent=15 // pred_fallthru
          _
        // Predicated region
        $region21: #{tpu_custom_call.1} parent=15 // pred_check
          %p240 = pneg %p89
        $region22: #{tpu_custom_call.1} parent=15 // pred_check_branch
          %242 = sbr.rel (%p240) target = $region24
        $region23: #{tpu_custom_call.1} parent=15 // pred_region
          %s243 = sand.u32 %s79, 1
          %s244 = scalar_lea.sflag [#allocation6], %s243
          %s245 = sand.u32 %s79, 1
          %s246 = smul.addr %s245, 4
          %s247 = scalar_lea.vmem [#allocation5], %s246
          %s249 = ssub.s32 64, 64
          %250 = vsyncadd %s244, %s249
          %s251 = smul.addr %s34, 4
          %s252 = sadd.s32 %s35, %s251
          %s253 = smul.addr %s252, 16
          %s254 = scalar_lea.hbm %s1, %s253
          %s255 = sshll.u32 %s247, 4
          %s256 = int_to_ptr.vmem [resolvable:$true] %s255
          %261 = dma.hbm_to_vmem [thread:$0]  %s254, 64, %s256, %s244, 16, 16, 1
        $region24: #{tpu_custom_call.1} parent=15 // pred_fallthru
          _
      $region16: #{tpu_custom_call.1} parent=5 // pred_fallthru
        _
      %p262 = scmp.le.s32.totalorder 1, %s27
      %p263 = scmp.lt.s32.totalorder %s27, 3
      %p264 = pnand %p262, %p263
      %p265 = pneg %p264
      // Predicated region
      $region25: #{tpu_custom_call.1} parent=5 // pred_check
        _
      $region26: #{tpu_custom_call.1} parent=5 // pred_check_branch
        %267 = sbr.rel (%p264) target = $region28
      $region27: #{tpu_custom_call.1} parent=5 // pred_region
        %s268 = ssub.s32 %s27, 1
        %s269 = sand.u32 %s54, 1
        %s270 = scalar_lea.sflag [#allocation3], %s269
        %s271 = sand.u32 %s54, 1
        %s272 = smul.addr %s271, 4
        %s273 = scalar_lea.vmem [#allocation2], %s272
        // Predicated region
        $region29: #{tpu_custom_call.1} parent=27 // pred_check
          %p274 = pneg %p67
        $region30: #{tpu_custom_call.1} parent=27 // pred_check_branch
          %276 = sbr.rel (%p274) target = $region32
        $region31: #{tpu_custom_call.1} parent=27 // pred_region
          %277 = dma.done %s270, 64
        $region32: #{tpu_custom_call.1} parent=27 // pred_fallthru
          _
        %s278 = sand.u32 %s82, 1
        %s279 = scalar_lea.sflag [#allocation6], %s278
        %s280 = sand.u32 %s82, 1
        %s281 = smul.addr %s280, 4
        %s282 = scalar_lea.vmem [#allocation5], %s281
        // Predicated region
        $region33: #{tpu_custom_call.1} parent=27 // pred_check
          %p283 = pneg %p95
        $region34: #{tpu_custom_call.1} parent=27 // pred_check_branch
          %285 = sbr.rel (%p283) target = $region36
        $region35: #{tpu_custom_call.1} parent=27 // pred_region
          %286 = dma.done %s279, 64
        $region36: #{tpu_custom_call.1} parent=27 // pred_fallthru
          _
        %s287 = sand.u32 %s54, 1
        %s288 = scalar_lea.sflag [#allocation3], %s287
        %s289 = sand.u32 %s54, 1
        %s290 = smul.addr %s289, 4
        %s291 = scalar_lea.vmem [#allocation2], %s290
        %p292 = pneg %p67
        %p293 = pneg %p64
        %s294 = sand.u32 %s82, 1
        %s295 = scalar_lea.sflag [#allocation6], %s294
        %s296 = sand.u32 %s82, 1
        %s297 = smul.addr %s296, 4
        %s298 = scalar_lea.vmem [#allocation5], %s297
        %p299 = pneg %p95
        %p300 = pneg %p92
        %p301 = pneg %p121
        %p302 = pneg %p118
        %s303 = sand.u32 %s108, 1
        %s304 = scalar_lea.sflag [#allocation4], %s303
        %s305 = sand.u32 %s108, 1
        %s306 = smul.addr %s305, 4
        %s307 = scalar_lea.vmem [#allocation7], %s306
        %p308 = pneg %p147
        %p309 = pneg %p144
        %s310 = sand.u32 %s32, 1
        %s311 = scalar_lea.sflag [#allocation9], %s310
        %s312 = sand.u32 %s134, 1
        %s313 = smul.addr %s312, 4
        %s314 = scalar_lea.vmem [#allocation8], %s313
        %p315 = pneg %p173
        %p316 = pneg %p170
        %s317 = sand.u32 %s32, 1
        %s318 = scalar_lea.sflag [#allocation9], %s317
        %s319 = sand.u32 %s160, 1
        %s320 = smul.addr %s319, 4
        %s321 = scalar_lea.vmem [#allocation10], %s320
        %p322 = pneg %p199
        %p323 = pneg %p196
        %s324 = sand.u32 %s186, 1
        %s325 = scalar_lea.sflag [#allocation12], %s324
        %s326 = sand.u32 %s186, 1
        %s327 = smul.addr %s326, 4
        %s328 = scalar_lea.vmem [#allocation11], %s327
        %p329 = scmp.eq.s32.totalorder %s37, 0
        // Predicated region
        $region37: #{tpu_custom_call.1} parent=27 // pred_check
          %p330 = pneg %p329
        $region38: #{tpu_custom_call.1} parent=27 // pred_check_branch
          %332 = sbr.rel (%p330) target = $region40
        $region39: #{tpu_custom_call.1} parent=27 // pred_region
          %333 = vst [vmem:[%s307] sm:$0xf] 0.0
          %334 = vst [vmem:[%s314] sm:$0xf] 0.0
          %335 = vst [vmem:[%s321] sm:$0xf] 0.0
          %336 = vst [vmem:[%s328] sm:$0xf] 0.0
        $region40: #{tpu_custom_call.1} parent=27 // pred_fallthru
          _
        %v337 = vld [vmem:[%s273] sm:$0x1]
        %v338 = vld [vmem:[%s273 + $0x1] sm:$0x1]
        %v339 = vld [vmem:[%s273 + $0x2] sm:$0x1]
        %v340 = vld [vmem:[%s273 + $0x3] sm:$0x1]
        %v341 = vunpack.c.l.bf16 %v337
        %v342 = vunpack.c.l.bf16 %v338
        %v343 = vunpack.c.l.bf16 %v339
        %v344 = vunpack.c.l.bf16 %v340
        %v345 = vld [vmem:[%s282] sm:$0x1]
        %v346 = vld [vmem:[%s282 + $0x1] sm:$0x1]
        %v347 = vld [vmem:[%s282 + $0x2] sm:$0x1]
        %v348 = vld [vmem:[%s282 + $0x3] sm:$0x1]
        %v349 = vunpack.c.l.bf16 %v345
        %v350 = vunpack.c.l.bf16 %v346
        %v351 = vunpack.c.l.bf16 %v347
        %v352 = vunpack.c.l.bf16 %v348
        %v353 = vxor.u32 %v341, 2147483648
        %v354 = vxor.u32 %v342, 2147483648
        %v355 = vxor.u32 %v343, 2147483648
        %v356 = vxor.u32 %v344, 2147483648
        %v357 = vmul.f32 %v353, 1.442695
        %v358 = vpow.pop %v357
        %v359 = vmul.f32 %v354, 1.442695
        %v360 = vpow.pop %v359
        %v361 = vmul.f32 %v355, 1.442695
        %v362 = vpow.pop %v361
        %v363 = vmul.f32 %v356, 1.442695
        %v364 = vpow.pop %v363
        %v365 = vadd.f32 %v358, 1.0
        %v366 = vadd.f32 %v360, 1.0
        %v367 = vadd.f32 %v362, 1.0
        %v368 = vadd.f32 %v364, 1.0
        %v369 = vrcp.pop %v365
        %v370 = vmul.f32 1.0, %v369
        %v371 = vrcp.pop %v366
        %v372 = vmul.f32 1.0, %v371
        %v373 = vrcp.pop %v367
        %v374 = vmul.f32 1.0, %v373
        %v375 = vrcp.pop %v368
        %v376 = vmul.f32 1.0, %v375
        %vm377 = vcmp.gt.f32.partialorder %v349, 0.0
        %vm378 = vcmp.gt.f32.partialorder %v350, 0.0
        %vm379 = vcmp.gt.f32.partialorder %v351, 0.0
        %vm380 = vcmp.gt.f32.partialorder %v352, 0.0
        %v381 = vsub.f32 0.0, %v341
        %v382 = vsub.f32 0.0, %v342
        %v383 = vsub.f32 0.0, %v343
        %v384 = vsub.f32 0.0, %v344
        %v385 = vsel %vm377, %v381, %v341
        %v386 = vsel %vm378, %v382, %v342
        %v387 = vsel %vm379, %v383, %v343
        %v388 = vsel %vm380, %v384, %v344
        %v389 = vmax.f32 %v385, 0.0
        %v390 = vmax.f32 %v386, 0.0
        %v391 = vmax.f32 %v387, 0.0
        %v392 = vmax.f32 %v388, 0.0
        %v393 = vsub.f32 1.0, %v370
        %v394 = vsub.f32 1.0, %v372
        %v395 = vsub.f32 1.0, %v374
        %v396 = vsub.f32 1.0, %v376
        %v397 = vmax.f32 %v370, %v393
        %v398 = vmax.f32 %v372, %v394
        %v399 = vmax.f32 %v374, %v395
        %v400 = vmax.f32 %v376, %v396
        %v401 = vlog2.pop %v397
        %v402 = vmul.f32 %v401, 0.6931472
        %v403 = vlog2.pop %v398
        %v404 = vmul.f32 %v403, 0.6931472
        %v405 = vlog2.pop %v399
        %v406 = vmul.f32 %v405, 0.6931472
        %v407 = vlog2.pop %v400
        %v408 = vmul.f32 %v407, 0.6931472
        %v409 = vsub.f32 %v389, %v402
        %v410 = vsub.f32 %v390, %v404
        %v411 = vsub.f32 %v391, %v406
        %v412 = vsub.f32 %v392, %v408
        %v413 = vld [vmem:[%s307] sm:$0xf]
        %v414 = vmul.f32 %v370, %v349
        %v415 = vmul.f32 %v372, %v350
        %v416 = vmul.f32 %v374, %v351
        %v417 = vmul.f32 %v376, %v352
        %vm418 = vcmask 1041408
        %v419 = vsel %vm418, %v414, 0.0
        %v420 = vrot.slane %v419, 4
        %v421 = vadd.f32 %v419, %v420
        %v422 = vrot.slane %v421, 2
        %v423 = vadd.f32 %v421, %v422
        %v424 = vrot.slane %v423, 1
        %v425 = vadd.f32 %v423, %v424
        %v426 = vsel %vm418, %v415, 0.0
        %v427 = vrot.slane %v426, 4
        %v428 = vadd.f32 %v426, %v427
        %v429 = vrot.slane %v428, 2
        %v430 = vadd.f32 %v428, %v429
        %v431 = vrot.slane %v430, 1
        %v432 = vadd.f32 %v430, %v431
        %v433 = vsel %vm418, %v416, 0.0
        %v434 = vrot.slane %v433, 4
        %v435 = vadd.f32 %v433, %v434
        %v436 = vrot.slane %v435, 2
        %v437 = vadd.f32 %v435, %v436
        %v438 = vrot.slane %v437, 1
        %v439 = vadd.f32 %v437, %v438
        %v440 = vsel %vm418, %v417, 0.0
        %v441 = vrot.slane %v440, 4
        %v442 = vadd.f32 %v440, %v441
        %v443 = vrot.slane %v442, 2
        %v444 = vadd.f32 %v442, %v443
        %v445 = vrot.slane %v444, 1
        %v446 = vadd.f32 %v444, %v445
        %vm451 = vcmask 1041409
        %v452 = vsel %vm451, %v432, %v425
        %vm453 = vcmask 1042434
        %v454 = vsel %vm453, %v439, %v452
        %vm455 = vcmask 1043459
        %v456 = vsel %vm455, %v446, %v454
        %v458 = vadd.f32 %v413, %v456
        %459 = vst [vmem:[%s307] sm:$0xf] %v458
        %v460 = vld [vmem:[%s314] sm:$0xf]
        %v461 = vsel %vm418, %v370, 0.0
        %v462 = vrot.slane %v461, 4
        %v463 = vadd.f32 %v461, %v462
        %v464 = vrot.slane %v463, 2
        %v465 = vadd.f32 %v463, %v464
        %v466 = vrot.slane %v465, 1
        %v467 = vadd.f32 %v465, %v466
        %v468 = vsel %vm418, %v372, 0.0
        %v469 = vrot.slane %v468, 4
        %v470 = vadd.f32 %v468, %v469
        %v471 = vrot.slane %v470, 2
        %v472 = vadd.f32 %v470, %v471
        %v473 = vrot.slane %v472, 1
        %v474 = vadd.f32 %v472, %v473
        %v475 = vsel %vm418, %v374, 0.0
        %v476 = vrot.slane %v475, 4
        %v477 = vadd.f32 %v475, %v476
        %v478 = vrot.slane %v477, 2
        %v479 = vadd.f32 %v477, %v478
        %v480 = vrot.slane %v479, 1
        %v481 = vadd.f32 %v479, %v480
        %v482 = vsel %vm418, %v376, 0.0
        %v483 = vrot.slane %v482, 4
        %v484 = vadd.f32 %v482, %v483
        %v485 = vrot.slane %v484, 2
        %v486 = vadd.f32 %v484, %v485
        %v487 = vrot.slane %v486, 1
        %v488 = vadd.f32 %v486, %v487
        %v493 = vsel %vm451, %v474, %v467
        %v494 = vsel %vm453, %v481, %v493
        %v495 = vsel %vm455, %v488, %v494
        %v497 = vadd.f32 %v460, %v495
        %498 = vst [vmem:[%s314] sm:$0xf] %v497
        %v499 = vld [vmem:[%s321] sm:$0xf]
        %v500 = vsel %vm418, %v349, 0.0
        %v501 = vrot.slane %v500, 4
        %v502 = vadd.f32 %v500, %v501
        %v503 = vrot.slane %v502, 2
        %v504 = vadd.f32 %v502, %v503
        %v505 = vrot.slane %v504, 1
        %v506 = vadd.f32 %v504, %v505
        %v507 = vsel %vm418, %v350, 0.0
        %v508 = vrot.slane %v507, 4
        %v509 = vadd.f32 %v507, %v508
        %v510 = vrot.slane %v509, 2
        %v511 = vadd.f32 %v509, %v510
        %v512 = vrot.slane %v511, 1
        %v513 = vadd.f32 %v511, %v512
        %v514 = vsel %vm418, %v351, 0.0
        %v515 = vrot.slane %v514, 4
        %v516 = vadd.f32 %v514, %v515
        %v517 = vrot.slane %v516, 2
        %v518 = vadd.f32 %v516, %v517
        %v519 = vrot.slane %v518, 1
        %v520 = vadd.f32 %v518, %v519
        %v521 = vsel %vm418, %v352, 0.0
        %v522 = vrot.slane %v521, 4
        %v523 = vadd.f32 %v521, %v522
        %v524 = vrot.slane %v523, 2
        %v525 = vadd.f32 %v523, %v524
        %v526 = vrot.slane %v525, 1
        %v527 = vadd.f32 %v525, %v526
        %v532 = vsel %vm451, %v513, %v506
        %v533 = vsel %vm453, %v520, %v532
        %v534 = vsel %vm455, %v527, %v533
        %v536 = vadd.f32 %v499, %v534
        %537 = vst [vmem:[%s321] sm:$0xf] %v536
        %v538 = vld [vmem:[%s328] sm:$0xf]
        %v539 = vsel %vm418, %v409, 0.0
        %v540 = vrot.slane %v539, 4
        %v541 = vadd.f32 %v539, %v540
        %v542 = vrot.slane %v541, 2
        %v543 = vadd.f32 %v541, %v542
        %v544 = vrot.slane %v543, 1
        %v545 = vadd.f32 %v543, %v544
        %v546 = vsel %vm418, %v410, 0.0
        %v547 = vrot.slane %v546, 4
        %v548 = vadd.f32 %v546, %v547
        %v549 = vrot.slane %v548, 2
        %v550 = vadd.f32 %v548, %v549
        %v551 = vrot.slane %v550, 1
        %v552 = vadd.f32 %v550, %v551
        %v553 = vsel %vm418, %v411, 0.0
        %v554 = vrot.slane %v553, 4
        %v555 = vadd.f32 %v553, %v554
        %v556 = vrot.slane %v555, 2
        %v557 = vadd.f32 %v555, %v556
        %v558 = vrot.slane %v557, 1
        %v559 = vadd.f32 %v557, %v558
        %v560 = vsel %vm418, %v412, 0.0
        %v561 = vrot.slane %v560, 4
        %v562 = vadd.f32 %v560, %v561
        %v563 = vrot.slane %v562, 2
        %v564 = vadd.f32 %v562, %v563
        %v565 = vrot.slane %v564, 1
        %v566 = vadd.f32 %v564, %v565
        %v571 = vsel %vm451, %v552, %v545
        %v572 = vsel %vm453, %v559, %v571
        %v573 = vsel %vm455, %v566, %v572
        %v575 = vadd.f32 %v538, %v573
        %576 = vst [vmem:[%s328] sm:$0xf] %v575
        %s577 = sand.u32 %s108, 1
        %s578 = scalar_lea.sflag [#allocation4], %s577
        %s579 = sand.u32 %s108, 1
        %s580 = smul.addr %s579, 4
        %s581 = scalar_lea.vmem [#allocation7], %s580
        %s582 = sand.u32 %s32, 1
        %s583 = scalar_lea.sflag [#allocation9], %s582
        %s584 = sand.u32 %s134, 1
        %s585 = smul.addr %s584, 4
        %s586 = scalar_lea.vmem [#allocation8], %s585
        %s587 = sand.u32 %s32, 1
        %s588 = scalar_lea.sflag [#allocation9], %s587
        %s589 = sand.u32 %s160, 1
        %s590 = smul.addr %s589, 4
        %s591 = scalar_lea.vmem [#allocation10], %s590
        %s592 = sand.u32 %s186, 1
        %s593 = scalar_lea.sflag [#allocation12], %s592
        %s594 = sand.u32 %s186, 1
        %s595 = smul.addr %s594, 4
        %s596 = scalar_lea.vmem [#allocation11], %s595
        // Predicated region
        $region41: #{tpu_custom_call.1} parent=27 // pred_check
          %p597 = pneg %p118
        $region42: #{tpu_custom_call.1} parent=27 // pred_check_branch
          %599 = sbr.rel (%p597) target = $region44
        $region43: #{tpu_custom_call.1} parent=27 // pred_region
          %s601 = ssub.s32 64, 64
          %602 = vsyncadd %s578, %s601
          %s603 = smul.addr %s36, 64
          %s604 = scalar_lea.hbm %s2, %s603
          %s606 = sshll.u32 %s581, 4
          %s607 = int_to_ptr.vmem [resolvable:$true] %s606
          %609 = dma.vmem_to_hbm [thread:$0]  %s607, 64, %s604, %s578
        $region44: #{tpu_custom_call.1} parent=27 // pred_fallthru
          _
        // Predicated region
        $region45: #{tpu_custom_call.1} parent=27 // pred_check
          %p610 = pneg %p144
        $region46: #{tpu_custom_call.1} parent=27 // pred_check_branch
          %612 = sbr.rel (%p610) target = $region48
        $region47: #{tpu_custom_call.1} parent=27 // pred_region
          %s614 = ssub.s32 64, 64
          %615 = vsyncadd %s583, %s614
          %s616 = smul.addr %s36, 64
          %s617 = scalar_lea.hbm %s3, %s616
          %s619 = sshll.u32 %s586, 4
          %s620 = int_to_ptr.vmem [resolvable:$true] %s619
          %622 = dma.vmem_to_hbm [thread:$0]  %s620, 64, %s617, %s583
        $region48: #{tpu_custom_call.1} parent=27 // pred_fallthru
          _
        // Predicated region
        $region49: #{tpu_custom_call.1} parent=27 // pred_check
          %p623 = pneg %p170
        $region50: #{tpu_custom_call.1} parent=27 // pred_check_branch
          %625 = sbr.rel (%p623) target = $region52
        $region51: #{tpu_custom_call.1} parent=27 // pred_region
          %s627 = ssub.s32 64, 64
          %628 = vsyncadd %s588, %s627
          %s629 = smul.addr %s36, 64
          %s630 = scalar_lea.hbm %s4, %s629
          %s632 = sshll.u32 %s591, 4
          %s633 = int_to_ptr.vmem [resolvable:$true] %s632
          %635 = dma.vmem_to_hbm [thread:$0]  %s633, 64, %s630, %s588
        $region52: #{tpu_custom_call.1} parent=27 // pred_fallthru
          _
        // Predicated region
        $region53: #{tpu_custom_call.1} parent=27 // pred_check
          %p636 = pneg %p196
        $region54: #{tpu_custom_call.1} parent=27 // pred_check_branch
          %638 = sbr.rel (%p636) target = $region56
        $region55: #{tpu_custom_call.1} parent=27 // pred_region
          %s640 = ssub.s32 64, 64
          %641 = vsyncadd %s593, %s640
          %s642 = smul.addr %s36, 64
          %s643 = scalar_lea.hbm %s5, %s642
          %s645 = sshll.u32 %s596, 4
          %s646 = int_to_ptr.vmem [resolvable:$true] %s645
          %648 = dma.vmem_to_hbm [thread:$0]  %s646, 64, %s643, %s593
        $region56: #{tpu_custom_call.1} parent=27 // pred_fallthru
          _
      $region28: #{tpu_custom_call.1} parent=5 // pred_fallthru
        _
      %p649 = scmp.le.s32.totalorder 2, %s27
      // Predicated region
      $region57: #{tpu_custom_call.1} parent=5 // pred_check
        %p650 = pneg %p649
      $region58: #{tpu_custom_call.1} parent=5 // pred_check_branch
        %652 = sbr.rel (%p650) target = $region60
      $region59: #{tpu_custom_call.1} parent=5 // pred_region
        %s653 = ssub.s32 %s27, 2
        // Predicated region
        $region61: #{tpu_custom_call.1} parent=59 // pred_check
          %p654 = pneg %p124
        $region62: #{tpu_custom_call.1} parent=59 // pred_check_branch
          %656 = sbr.rel (%p654) target = $region64
        $region63: #{tpu_custom_call.1} parent=59 // pred_region
          %s657 = sand.u32 %s109, 1
          %s658 = scalar_lea.sflag [#allocation4], %s657
          %s659 = sand.u32 %s109, 1
          %s660 = smul.addr %s659, 4
          %s661 = scalar_lea.vmem [#allocation7], %s660
          %662 = dma.done %s658, 64
        $region64: #{tpu_custom_call.1} parent=59 // pred_fallthru
          _
        // Predicated region
        $region65: #{tpu_custom_call.1} parent=59 // pred_check
          %p663 = pneg %p150
        $region66: #{tpu_custom_call.1} parent=59 // pred_check_branch
          %665 = sbr.rel (%p663) target = $region68
        $region67: #{tpu_custom_call.1} parent=59 // pred_region
          %s666 = sand.u32 %s33, 1
          %s667 = scalar_lea.sflag [#allocation9], %s666
          %s668 = sand.u32 %s135, 1
          %s669 = smul.addr %s668, 4
          %s670 = scalar_lea.vmem [#allocation8], %s669
          %671 = dma.done %s667, 64
        $region68: #{tpu_custom_call.1} parent=59 // pred_fallthru
          _
        // Predicated region
        $region69: #{tpu_custom_call.1} parent=59 // pred_check
          %p672 = pneg %p176
        $region70: #{tpu_custom_call.1} parent=59 // pred_check_branch
          %674 = sbr.rel (%p672) target = $region72
        $region71: #{tpu_custom_call.1} parent=59 // pred_region
          %s675 = sand.u32 %s33, 1
          %s676 = scalar_lea.sflag [#allocation9], %s675
          %s677 = sand.u32 %s161, 1
          %s678 = smul.addr %s677, 4
          %s679 = scalar_lea.vmem [#allocation10], %s678
          %680 = dma.done %s676, 64
        $region72: #{tpu_custom_call.1} parent=59 // pred_fallthru
          _
        // Predicated region
        $region73: #{tpu_custom_call.1} parent=59 // pred_check
          %p681 = pneg %p202
        $region74: #{tpu_custom_call.1} parent=59 // pred_check_branch
          %683 = sbr.rel (%p681) target = $region76
        $region75: #{tpu_custom_call.1} parent=59 // pred_region
          %s684 = sand.u32 %s187, 1
          %s685 = scalar_lea.sflag [#allocation12], %s684
          %s686 = sand.u32 %s187, 1
          %s687 = smul.addr %s686, 4
          %s688 = scalar_lea.vmem [#allocation11], %s687
          %689 = dma.done %s685, 64
        $region76: #{tpu_custom_call.1} parent=59 // pred_fallthru
          _
      $region60: #{tpu_custom_call.1} parent=5 // pred_fallthru
        _
    $region6: #{tpu_custom_call.1} parent=1 // loop_footer
      %s31 = sadd.s32 1, %s27
    $region7: #{tpu_custom_call.1} parent=1 // loop_footer_branch
      %26 = sbr.rel target = $region3
    $region8: #{tpu_custom_call.1} parent=1 // loop_exit
      _
    %690 = vsyncpa [#allocation3], 1
    %s691 = scalar_lea.sflag [#allocation3], 1
    %692 = vsyncpa %s691, 1
    %693 = vsyncpa [#allocation6], 1
    %s694 = scalar_lea.sflag [#allocation6], 1
    %695 = vsyncpa %s694, 1
    %696 = vsyncpa [#allocation4], 1
    %s697 = scalar_lea.sflag [#allocation4], 1
    %698 = vsyncpa %s697, 1
    %699 = vsyncpa [#allocation9], 1
    %s700 = scalar_lea.sflag [#allocation9], 1
    %701 = vsyncpa %s700, 1
    %702 = vsyncpa [#allocation12], 1
    %s703 = scalar_lea.sflag [#allocation12], 1
    %704 = vsyncpa %s703, 1

</llo_original>
